<compile_context>
chip_gen: v5e
topology: v5e:2x2
jax: 0.10.0
libtpu: 0.0.40
codegen_flags: <defaults>
</compile_context>

<pallas_src>
import functools

import jax
import jax.numpy as jnp
from jax.experimental import pallas as pl
from jax.experimental.pallas import tpu as pltpu


def _round_up(n, m):
    return ((n + m - 1) // m) * m


def dqn_kernel(x_ref, w1_ref, b1_ref, w2_ref, b2_ref, w3_ref, b3_ref, o_ref):
    # In-kernel bf16 cast of the activations (x arrives as f32 straight from
    # HBM; the VPU cast is hidden under DMA slack).
    x = x_ref[...].astype(jnp.bfloat16)
    # fc1 + relu: bf16 x bf16 -> f32 accumulate on the MXU.
    h1 = jnp.dot(x, w1_ref[...], preferred_element_type=jnp.float32)
    h1 = jnp.maximum(h1 + b1_ref[...], 0.0)
    # fc2 + relu.
    h2 = jnp.dot(h1.astype(jnp.bfloat16), w2_ref[...],
                 preferred_element_type=jnp.float32)
    h2 = jnp.maximum(h2 + b2_ref[...], 0.0)
    # fc3 (no activation). Logical-width store: the HBM region is contiguous
    # row-major, so the writeback DMA stays dense even though the in-VMEM vst
    # is lane-masked.
    out = jnp.dot(h2.astype(jnp.bfloat16), w3_ref[...],
                  preferred_element_type=jnp.float32)
    o_ref[...] = (out + b3_ref[...]).astype(o_ref.dtype)


@functools.partial(jax.jit, static_argnames=("block_b",))
def dqn_forward(x, w1, b1, w2, b2, w3, b3, *, block_b=4096):
    """x: (B, input_dim) f32. Weights stored (in, out); biases (1, out).

    Returns (B, out_dim) f32 == relu(relu(x@w1+b1)@w2+b2)@w3+b3 (bf16 MXU ops,
    f32 accumulation).
    """
    B, in_dim = x.shape
    h1_dim = w1.shape[1]
    h2_dim = w2.shape[1]
    out_dim = w3.shape[1]

    # One-time tiny casts of the (VMEM-resident) weights; biases stay f32.
    w1b = w1.astype(jnp.bfloat16)
    w2b = w2.astype(jnp.bfloat16)
    w3b = w3.astype(jnp.bfloat16)

    # Batch tile selection:
    #   * multiple of 16 (sublane-safe for f32 and bf16 layouts),
    #   * at least 2 grid steps when possible so ("parallel",) splits across
    #     both v7x TensorCores,
    #   * capped near B so tiny batches get an exact (or near-exact) block,
    #   * ragged last block handled by Pallas edge masking (no jnp.pad of x).
    block_b = max(16, (block_b // 16) * 16)
    half = _round_up(-(-B // 2), 16)          # ceil(B/2) rounded to sublanes
    tb = min(block_b, half, _round_up(B, 8))
    grid = (pl.cdiv(B, tb),)

    const = lambda i: (0, 0)  # weights/biases: VMEM-resident across the grid

    out = pl.pallas_call(
        dqn_kernel,
        out_shape=jax.ShapeDtypeStruct((B, out_dim), jnp.float32),
        grid=grid,
        in_specs=[
            pl.BlockSpec((tb, in_dim), lambda i: (i, 0)),   # x: tiled on batch
            pl.BlockSpec((in_dim, h1_dim), const),          # w1 (resident)
            pl.BlockSpec((1, h1_dim), const),               # b1 (resident)
            pl.BlockSpec((h1_dim, h2_dim), const),          # w2 (resident)
            pl.BlockSpec((1, h2_dim), const),               # b2 (resident)
            pl.BlockSpec((h2_dim, out_dim), const),         # w3 (resident)
            pl.BlockSpec((1, out_dim), const),              # b3 (resident)
        ],
        out_specs=pl.BlockSpec((tb, out_dim), lambda i: (i, 0)),
        compiler_params=pltpu.CompilerParams(
            dimension_semantics=("parallel",),      # megacore split on v7x
            vmem_limit_bytes=32 * 1024 * 1024,      # headroom over v5e's 16 MiB default
        ),
    )(x, w1b, b1, w2b, b2, w3b, b3)

    return out


def init_params(key, input_dim, output_dim):
    """Deterministic init mimicking nn.Linear default (uniform +/- 1/sqrt(fan_in))."""
    def linear(key, fan_in, fan_out):
        kw, kb = jax.random.split(key)
        bound = 1.0 / jnp.sqrt(fan_in)
        # stored as (in, out) -- transposed relative to PyTorch's (out, in)
        w = jax.random.uniform(kw, (fan_in, fan_out), jnp.float32, -bound, bound)
        b = jax.random.uniform(kb, (1, fan_out), jnp.float32, -bound, bound)
        return w, b

    k1, k2, k3 = jax.random.split(key, 3)
    w1, b1 = linear(k1, input_dim, 64)
    w2, b2 = linear(k2, 64, 32)
    w3, b3 = linear(k3, 32, output_dim)
    return w1, b1, w2, b2, w3, b3


def reference_forward_bf16(x, w1, b1, w2, b2, w3, b3):
    """Pure-JAX reference with the same bf16-operand / f32-accumulate math as the kernel."""
    h1 = jnp.maximum(
        jnp.dot(x.astype(jnp.bfloat16), w1.astype(jnp.bfloat16),
                preferred_element_type=jnp.float32) + b1, 0.0)
    h2 = jnp.maximum(
        jnp.dot(h1.astype(jnp.bfloat16), w2.astype(jnp.bfloat16),
                preferred_element_type=jnp.float32) + b2, 0.0)
    return jnp.dot(h2.astype(jnp.bfloat16), w3.astype(jnp.bfloat16),
                   preferred_element_type=jnp.float32) + b3


def reference_forward_f32(x, w1, b1, w2, b2, w3, b3):
    h1 = jnp.maximum(x @ w1 + b1, 0.0)
    h2 = jnp.maximum(h1 @ w2 + b2, 0.0)
    return h2 @ w3 + b3


if __name__ == "__main__":
    input_dim = 16   # state dimension
    output_dim = 4   # number of actions
    batch = 8

    key = jax.random.PRNGKey(0)
    kx, kp, kx2 = jax.random.split(key, 3)
    params = init_params(kp, input_dim, output_dim)

    # Small batch (single grid step, exact tile).
    x = jax.random.normal(kx, (batch, input_dim), jnp.float32)
    out = jax.block_until_ready(dqn_forward(x, *params))
    assert out.shape == (batch, output_dim)
    ref_bf16 = reference_forward_bf16(x, *params)
    ref_f32 = reference_forward_f32(x, *params)
    assert jnp.allclose(out, ref_bf16, atol=1e-4, rtol=1e-4), "mismatch vs bf16 reference"
    assert jnp.allclose(out, ref_f32, atol=5e-2, rtol=5e-2), "mismatch vs f32 reference"

    # Multi-tile batch with a ragged last block (grid=3, masked edge store).
    x2 = jax.random.normal(kx2, (300, input_dim), jnp.float32)
    out2 = jax.block_until_ready(dqn_forward(x2, *params, block_b=128))
    ref2 = reference_forward_bf16(x2, *params)
    assert out2.shape == (300, output_dim)
    assert jnp.allclose(out2, ref2, atol=1e-4, rtol=1e-4), "mismatch vs reference (tiled)"

    # Default tile path: tb is chosen to give >=2 grid steps (v7x megacore).
    out3 = jax.block_until_ready(dqn_forward(x2, *params))
    assert out3.shape == (300, output_dim)
    assert jnp.allclose(out3, ref2, atol=1e-4, rtol=1e-4), "mismatch vs reference (default tile)"

    print("KERNEL_OK")
</pallas_src>

<mosaic_0001>
module attributes {stable_mosaic.version = 11 : i64} {
  func.func @dqn_kernel(%arg0: i32, %arg1: memref<8x16xf32, #tpu.memory_space<vmem>>, %arg2: memref<16x64xbf16, #tpu.memory_space<vmem>>, %arg3: memref<1x64xf32, #tpu.memory_space<vmem>>, %arg4: memref<64x32xbf16, #tpu.memory_space<vmem>>, %arg5: memref<1x32xf32, #tpu.memory_space<vmem>>, %arg6: memref<32x4xbf16, #tpu.memory_space<vmem>>, %arg7: memref<1x4xf32, #tpu.memory_space<vmem>>, %arg8: memref<8x4xf32, #tpu.memory_space<vmem>>) attributes {dimension_semantics = [#tpu.dimension_semantics<parallel>], iteration_bounds = array<i64: 1>, scalar_prefetch = 0 : i64, scratch_operands = 0 : i64, tpu.core_type = #tpu.core_type<tc>, window_params = [{transform_indices = @transform_0, window_bounds = array<i64: 8, 16>}, {pipeline_mode = #tpu.pipeline_mode<synchronous>, transform_indices = @transform_1, window_bounds = array<i64: 16, 64>}, {pipeline_mode = #tpu.pipeline_mode<synchronous>, transform_indices = @transform_2, window_bounds = array<i64: 1, 64>}, {pipeline_mode = #tpu.pipeline_mode<synchronous>, transform_indices = @transform_3, window_bounds = array<i64: 64, 32>}, {pipeline_mode = #tpu.pipeline_mode<synchronous>, transform_indices = @transform_4, window_bounds = array<i64: 1, 32>}, {pipeline_mode = #tpu.pipeline_mode<synchronous>, transform_indices = @transform_5, window_bounds = array<i64: 32, 4>}, {pipeline_mode = #tpu.pipeline_mode<synchronous>, transform_indices = @transform_6, window_bounds = array<i64: 1, 4>}, {transform_indices = @transform_7, window_bounds = array<i64: 8, 4>}]} {
    %c0 = arith.constant 0 : index
    %c0_0 = arith.constant 0 : index
    %0 = vector.load %arg1[%c0, %c0_0] : memref<8x16xf32, #tpu.memory_space<vmem>>, vector<8x16xf32>
    %1 = arith.truncf %0 : vector<8x16xf32> to vector<8x16xbf16>
    %c0_1 = arith.constant 0 : index
    %c0_2 = arith.constant 0 : index
    %2 = vector.load %arg2[%c0_1, %c0_2] : memref<16x64xbf16, #tpu.memory_space<vmem>>, vector<16x64xbf16>
    %cst = arith.constant dense<0.000000e+00> : vector<8x64xf32>
    %3 = tpu.matmul %1, %2, %cst {dimension_numbers = #tpu.dot_dimension_numbers<[1], [0], [0], [1], [0, 0, 1, 1], [], []>} : vector<8x16xbf16>, vector<16x64xbf16>, vector<8x64xf32> -> vector<8x64xf32>
    %c0_3 = arith.constant 0 : index
    %c0_4 = arith.constant 0 : index
    %4 = vector.load %arg3[%c0_3, %c0_4] : memref<1x64xf32, #tpu.memory_space<vmem>>, vector<1x64xf32>
    %5 = vector.broadcast %4 : vector<1x64xf32> to vector<8x64xf32>
    %6 = arith.addf %3, %5 : vector<8x64xf32>
    %cst_5 = arith.constant 0.000000e+00 : f32
    %7 = vector.broadcast %cst_5 : f32 to vector<8x64xf32>
    %8 = arith.maximumf %6, %7 : vector<8x64xf32>
    %9 = arith.truncf %8 : vector<8x64xf32> to vector<8x64xbf16>
    %c0_6 = arith.constant 0 : index
    %c0_7 = arith.constant 0 : index
    %10 = vector.load %arg4[%c0_6, %c0_7] : memref<64x32xbf16, #tpu.memory_space<vmem>>, vector<64x32xbf16>
    %cst_8 = arith.constant dense<0.000000e+00> : vector<8x32xf32>
    %11 = tpu.matmul %9, %10, %cst_8 {dimension_numbers = #tpu.dot_dimension_numbers<[1], [0], [0], [1], [0, 0, 1, 1], [], []>} : vector<8x64xbf16>, vector<64x32xbf16>, vector<8x32xf32> -> vector<8x32xf32>
    %c0_9 = arith.constant 0 : index
    %c0_10 = arith.constant 0 : index
    %12 = vector.load %arg5[%c0_9, %c0_10] : memref<1x32xf32, #tpu.memory_space<vmem>>, vector<1x32xf32>
    %13 = vector.broadcast %12 : vector<1x32xf32> to vector<8x32xf32>
    %14 = arith.addf %11, %13 : vector<8x32xf32>
    %cst_11 = arith.constant 0.000000e+00 : f32
    %15 = vector.broadcast %cst_11 : f32 to vector<8x32xf32>
    %16 = arith.maximumf %14, %15 : vector<8x32xf32>
    %17 = arith.truncf %16 : vector<8x32xf32> to vector<8x32xbf16>
    %c0_12 = arith.constant 0 : index
    %c0_13 = arith.constant 0 : index
    %18 = vector.load %arg6[%c0_12, %c0_13] : memref<32x4xbf16, #tpu.memory_space<vmem>>, vector<32x4xbf16>
    %cst_14 = arith.constant dense<0.000000e+00> : vector<8x4xf32>
    %19 = tpu.matmul %17, %18, %cst_14 {dimension_numbers = #tpu.dot_dimension_numbers<[1], [0], [0], [1], [0, 0, 1, 1], [], []>} : vector<8x32xbf16>, vector<32x4xbf16>, vector<8x4xf32> -> vector<8x4xf32>
    %c0_15 = arith.constant 0 : index
    %c0_16 = arith.constant 0 : index
    %20 = vector.load %arg7[%c0_15, %c0_16] : memref<1x4xf32, #tpu.memory_space<vmem>>, vector<1x4xf32>
    %21 = vector.broadcast %20 : vector<1x4xf32> to vector<8x4xf32>
    %22 = arith.addf %19, %21 : vector<8x4xf32>
    %c0_17 = arith.constant 0 : index
    %c0_18 = arith.constant 0 : index
    %23 = vector.load %arg8[%c0_17, %c0_18] : memref<8x4xf32, #tpu.memory_space<vmem>>, vector<8x4xf32>
    tpu.vector_store %arg8[%c0_17, %c0_18], %22 {strides = array<i32>} : memref<8x4xf32, #tpu.memory_space<vmem>>, vector<8x4xf32>,
    return
  }
  func.func @transform_0(%arg0: i32) -> (i32, i32) {
    %c0_i32 = arith.constant 0 : i32
    %c0_i32_0 = arith.constant 0 : i32
    return %arg0, %c0_i32 : i32, i32
  }
  func.func @transform_1(%arg0: i32) -> (i32, i32) {
    %c0_i32 = arith.constant 0 : i32
    %c0_i32_0 = arith.constant 0 : i32
    %c0_i32_1 = arith.constant 0 : i32
    return %c0_i32, %c0_i32_0 : i32, i32
  }
  func.func @transform_2(%arg0: i32) -> (i32, i32) {
    %c0_i32 = arith.constant 0 : i32
    %c0_i32_0 = arith.constant 0 : i32
    %c0_i32_1 = arith.constant 0 : i32
    return %c0_i32, %c0_i32_0 : i32, i32
  }
  func.func @transform_3(%arg0: i32) -> (i32, i32) {
    %c0_i32 = arith.constant 0 : i32
    %c0_i32_0 = arith.constant 0 : i32
    %c0_i32_1 = arith.constant 0 : i32
    return %c0_i32, %c0_i32_0 : i32, i32
  }
  func.func @transform_4(%arg0: i32) -> (i32, i32) {
    %c0_i32 = arith.constant 0 : i32
    %c0_i32_0 = arith.constant 0 : i32
    %c0_i32_1 = arith.constant 0 : i32
    return %c0_i32, %c0_i32_0 : i32, i32
  }
  func.func @transform_5(%arg0: i32) -> (i32, i32) {
    %c0_i32 = arith.constant 0 : i32
    %c0_i32_0 = arith.constant 0 : i32
    %c0_i32_1 = arith.constant 0 : i32
    return %c0_i32, %c0_i32_0 : i32, i32
  }
  func.func @transform_6(%arg0: i32) -> (i32, i32) {
    %c0_i32 = arith.constant 0 : i32
    %c0_i32_0 = arith.constant 0 : i32
    %c0_i32_1 = arith.constant 0 : i32
    return %c0_i32, %c0_i32_0 : i32, i32
  }
  func.func @transform_7(%arg0: i32) -> (i32, i32) {
    %c0_i32 = arith.constant 0 : i32
    %c0_i32_0 = arith.constant 0 : i32
    return %arg0, %c0_i32 : i32, i32
  }
}

</mosaic_0001>

<llo_original>
// kernel: dqn_forward.1
$region0: #{dqn_forward.1}
  #allocation0 [shape = 'u32[]', space=smem, size = 0x4, offset = 0x4, fixed_abs, tag = 'smem constant byte address 0x4 - core index']
  #allocation1 [shape = 'u32[72,128]{1,0:T(1,128)}', space=vmem, size = 0x9000, scoped, tag = 'internal scratch']
  %s0 = inlined_call_operand.vmem [shape: f32[8,16], index: 0, kind: input, shape index: {}]
  %s1 = inlined_call_operand.vmem [shape: bf16[16,64], index: 1, kind: input, shape index: {}]
  %s2 = inlined_call_operand.vmem [shape: f32[1,64], index: 2, kind: input, shape index: {}]
  %s3 = inlined_call_operand.vmem [shape: bf16[64,32], index: 3, kind: input, shape index: {}]
  %s4 = inlined_call_operand.vmem [shape: f32[1,32], index: 4, kind: input, shape index: {}]
  %s5 = inlined_call_operand.vmem [shape: bf16[32,4], index: 5, kind: input, shape index: {}]
  %s6 = inlined_call_operand.vmem [shape: f32[1,4], index: 6, kind: input, shape index: {}]
  %s7 = inlined_call_operand.vmem [shape: f32[8,4], index: 7, kind: output, shape index: {}]
  %s8 = sld [smem:[#allocation0]]
  $region38: #{dqn_forward.1} parent=0
    _
  %s10 = ssub.s32 1, %s8
  %s11 = scalar_select 0, %s10, %s8
  // Predicated region
  $region2: #{dqn_forward.1} parent=0 // pred_check
    _
  $region3: #{dqn_forward.1} parent=0 // pred_check_branch
    %13 = sbr.rel (0) target = $region5
  $region4: #{dqn_forward.1} parent=0 // pred_region
    _
  $region5: #{dqn_forward.1} parent=0 // pred_fallthru
    _
  // Predicated region
  $region6: #{dqn_forward.1} parent=0 // pred_check
    _
  $region7: #{dqn_forward.1} parent=0 // pred_check_branch
    %15 = sbr.rel (0) target = $region9
  $region8: #{dqn_forward.1} parent=0 // pred_region
    _
  $region9: #{dqn_forward.1} parent=0 // pred_fallthru
    _
  // Predicated region
  $region10: #{dqn_forward.1} parent=0 // pred_check
    _
  $region11: #{dqn_forward.1} parent=0 // pred_check_branch
    %17 = sbr.rel (0) target = $region13
  $region12: #{dqn_forward.1} parent=0 // pred_region
    _
  $region13: #{dqn_forward.1} parent=0 // pred_fallthru
    _
  // Predicated region
  $region14: #{dqn_forward.1} parent=0 // pred_check
    _
  $region15: #{dqn_forward.1} parent=0 // pred_check_branch
    %19 = sbr.rel (0) target = $region17
  $region16: #{dqn_forward.1} parent=0 // pred_region
    _
  $region17: #{dqn_forward.1} parent=0 // pred_fallthru
    _
  // Predicated region
  $region18: #{dqn_forward.1} parent=0 // pred_check
    _
  $region19: #{dqn_forward.1} parent=0 // pred_check_branch
    %21 = sbr.rel (0) target = $region21
  $region20: #{dqn_forward.1} parent=0 // pred_region
    _
  $region21: #{dqn_forward.1} parent=0 // pred_fallthru
    _
  // Predicated region
  $region22: #{dqn_forward.1} parent=0 // pred_check
    _
  $region23: #{dqn_forward.1} parent=0 // pred_check_branch
    %23 = sbr.rel (0) target = $region25
  $region24: #{dqn_forward.1} parent=0 // pred_region
    _
  $region25: #{dqn_forward.1} parent=0 // pred_fallthru
    _
  // Predicated region
  $region26: #{dqn_forward.1} parent=0 // pred_check
    _
  $region27: #{dqn_forward.1} parent=0 // pred_check_branch
    %25 = sbr.rel (0) target = $region29
  $region28: #{dqn_forward.1} parent=0 // pred_region
    _
  $region29: #{dqn_forward.1} parent=0 // pred_fallthru
    _
  %v27 = vld [vmem:[%s0] sm:$0xff]
  %v28 = vpack.c.bf16 %v27, %v27
  %v29 = vld [vmem:[%s1] sm:$0xf]
  %v30 = vld [vmem:[%s1 + $0x4] sm:$0xf]
  %v31 = vld [vmem:[%s2] sm:$0x1]
  %v33 = vperm.slane %v31, 0
  %v37 = vunpack.c.l.b16 %v29
  %v38 = vunpack.c.l.b16 %v30
  %v39 = vpack.c.b16 %v38, %v37
  %vm41 = vcmask 130048
  %v43 = vsel %vm41, %v28, 0
  %45 = vmatpush.bf16.msra.mxu0 0
  %46 = vmatpush.bf16.msra.mxu0 0
  %47 = vmatpush.bf16.msra.mxu0 0
  %48 = vmatpush.bf16.msra.mxu0 0
  %49 = vmatpush.bf16.msra.mxu0 0
  %50 = vmatpush.bf16.msra.mxu0 0
  %51 = vmatpush.bf16.msra.mxu0 0
  %52 = vmatpush.bf16.msra.mxu0 %v39
  %53 = vmatmul.bf16.gmra.mxu0 %v43
  %v54 = vpop.f32.mrf.mxu0
  %v55 = vadd.f32 %v33, %v54
  %v56 = vpop.f32.mrf.mxu0
  %57 = vdwg.mxu0
  %v58 = vmax.f32 %v55, 0.0
  %v59 = vpack.c.bf16 %v58, %v58
  %v60 = vld [vmem:[%s3] sm:$0xf]
  %v61 = vld [vmem:[%s3 + $0x4] sm:$0xf]
  %v62 = vld [vmem:[%s3 + $0x8] sm:$0xf]
  %v63 = vld [vmem:[%s3 + $0xc] sm:$0xf]
  %v64 = vld [vmem:[%s3 + $0x10] sm:$0xf]
  %v65 = vld [vmem:[%s3 + $0x14] sm:$0xf]
  %v66 = vld [vmem:[%s3 + $0x18] sm:$0xf]
  %v67 = vld [vmem:[%s3 + $0x1c] sm:$0xf]
  %v68 = vld [vmem:[%s4] sm:$0x1]
  %v70 = vperm.slane %v68, 0
  %v80 = vunpack.c.l.b16 %v60
  %v81 = vunpack.c.l.b16 %v61
  %v82 = vunpack.c.l.b16 %v62
  %v83 = vunpack.c.l.b16 %v63
  %v84 = vunpack.c.l.b16 %v64
  %v85 = vunpack.c.l.b16 %v65
  %v86 = vunpack.c.l.b16 %v66
  %v87 = vunpack.c.l.b16 %v67
  %v88 = vpack.c.b16 %v81, %v80
  %v89 = vpack.c.b16 %v83, %v82
  %v90 = vpack.c.b16 %v85, %v84
  %v91 = vpack.c.b16 %v87, %v86
  %vm96 = vcmask 523264
  %v98 = vsel %vm96, %v59, 0
  %100 = vmatpush.bf16.msra.mxu0 0
  %101 = vmatpush.bf16.msra.mxu0 0
  %102 = vmatpush.bf16.msra.mxu0 0
  %103 = vmatpush.bf16.msra.mxu0 0
  %104 = vmatpush.bf16.msra.mxu0 %v91
  %105 = vmatpush.bf16.msra.mxu0 %v90
  %106 = vmatpush.bf16.msra.mxu0 %v89
  %107 = vmatpush.bf16.msra.mxu0 %v88
  %108 = vmatmul.bf16.gmra.mxu0 %v98
  %v109 = vpop.f32.mrf.mxu0
  %v110 = vadd.f32 %v70, %v109
  %v111 = vpop.f32.mrf.mxu0
  %112 = vdwg.mxu0
  %v113 = vmax.f32 %v110, 0.0
  %v114 = vpack.c.bf16 %v113, %v113
  %v115 = vld [vmem:[%s5] sm:$0xf]
  %v116 = vld [vmem:[%s5 + $0x4] sm:$0xf]
  %v117 = vld [vmem:[%s5 + $0x8] sm:$0xf]
  %v118 = vld [vmem:[%s5 + $0xc] sm:$0xf]
  %v119 = vld [vmem:[%s6] sm:$0x1]
  %v121 = vperm.slane %v119, 0
  %v127 = vunpack.c.l.b16 %v115
  %v128 = vunpack.c.l.b16 %v116
  %v129 = vunpack.c.l.b16 %v117
  %v130 = vunpack.c.l.b16 %v118
  %v131 = vpack.c.b16 %v128, %v127
  %v132 = vpack.c.b16 %v130, %v129
  %vm135 = vcmask 261120
  %v137 = vsel %vm135, %v114, 0
  %139 = vmatpush.bf16.msra.mxu0 0
  %140 = vmatpush.bf16.msra.mxu0 0
  %141 = vmatpush.bf16.msra.mxu0 0
  %142 = vmatpush.bf16.msra.mxu0 0
  %143 = vmatpush.bf16.msra.mxu0 0
  %144 = vmatpush.bf16.msra.mxu0 0
  %145 = vmatpush.bf16.msra.mxu0 %v132
  %146 = vmatpush.bf16.msra.mxu0 %v131
  %147 = vmatmul.bf16.gmra.mxu0 %v137
  %v148 = vpop.f32.mrf.mxu0
  %v149 = vadd.f32 %v121, %v148
  %v150 = vpop.f32.mrf.mxu0
  %151 = vdwg.mxu0
  %vm152 = vcmask 31744
  %153 = vst.msk [vmem:[%s7] sm:$0xff] %vm152, %v149
  // Predicated region
  $region30: #{dqn_forward.1} parent=0 // pred_check
    _
  $region31: #{dqn_forward.1} parent=0 // pred_check_branch
    %155 = sbr.rel (0) target = $region33
  $region32: #{dqn_forward.1} parent=0 // pred_region
    _
  $region33: #{dqn_forward.1} parent=0 // pred_fallthru
    _
  // Predicated region
  $region34: #{dqn_forward.1} parent=0 // pred_check
    _
  $region35: #{dqn_forward.1} parent=0 // pred_check_branch
    %157 = sbr.rel (0) target = $region37
  $region36: #{dqn_forward.1} parent=0 // pred_region
    _
  $region37: #{dqn_forward.1} parent=0 // pred_fallthru
    _

</llo_original>
